<compile_context>
chip_gen: v6e
topology: v6e:2x2x1
jax: 0.10.0
libtpu: 0.0.40
codegen_flags: <defaults>
</compile_context>

<pallas_src>
import functools

import jax
import jax.numpy as jnp
from jax.experimental import pallas as pl
from jax.experimental.pallas import tpu as pltpu

_SUBLANE = 8

# Pairs whose combined bytes exceed this are streamed with a tiled grid
# instead of being brought whole into VMEM.
_STREAM_PAIR_BYTES = 2 * 1024 * 1024
# Cumulative VMEM budget for the fused single-step ("resident") call.
_RESIDENT_BUDGET_BYTES = 8 * 1024 * 1024
# Per-input block target for the streamed path (~2 MiB f32 blocks stream at
# ~85% of HBM roofline on v6e; 2 inputs x 2 buffers + tiny acc ~ 8-9 MiB).
_STREAM_BLOCK_BYTES = 2 * 1024 * 1024
# Caps the unrolled 8-row-group VALU adds at 128 per step.
_MAX_BLOCK_ROWS = 1024
# Safe on all generations: v5e/v6e have 128 MiB physical VMEM, v7x has 64 MiB.
_VMEM_LIMIT_BYTES = 48 * 1024 * 1024

_KIND_MSE = 0
_KIND_DOT = 1


def _cdiv(a, b):
    return -(-a // b)


def _round_up(a, b):
    return _cdiv(a, b) * b


def _as_2d(t):
    """Free (layout-compatible) reshape to 2-D; never copies or casts."""
    if t.ndim == 0:
        return t.reshape(1, 1)
    if t.ndim == 1:
        return t.reshape(1, t.shape[0])
    if t.ndim == 2:
        return t
    return t.reshape(-1, t.shape[-1])


# --------------------------------------------------------------------------
# Resident path: all (a, b) pairs whole in VMEM, one grid-less kernel step.
# --------------------------------------------------------------------------
def _make_resident_kernel(kinds, inv_n):
    def kernel(*refs):
        in_refs = refs[:-1]
        o_ref = refs[-1]
        mse_sum = jnp.float32(0.0)
        dot_sum = jnp.float32(0.0)
        for p, kind in enumerate(kinds):           # static Python branch per pair
            a = in_refs[2 * p][...].astype(jnp.float32)
            b = in_refs[2 * p + 1][...].astype(jnp.float32)
            if kind == _KIND_MSE:
                d = a - b
                mse_sum = mse_sum + jnp.sum(d * d)
            else:
                dot_sum = dot_sum + jnp.sum(a * b)
        # 1/N folded into the finalize (better rounding, one multiply total).
        o_ref[0, 0] = mse_sum * jnp.float32(inv_n) - dot_sum
    return kernel


def _resident_sum(pairs, inv_n):
    kinds = tuple(kind for _, _, kind in pairs)
    operands = []
    for a2, b2, _ in pairs:
        operands += [a2, b2]
    out = pl.pallas_call(
        _make_resident_kernel(kinds, inv_n),
        out_shape=jax.ShapeDtypeStruct((1, 1), jnp.float32),
        in_specs=[pl.BlockSpec(memory_space=pltpu.VMEM)] * len(operands),
        out_specs=pl.BlockSpec(memory_space=pltpu.SMEM),
        compiler_params=pltpu.CompilerParams(vmem_limit_bytes=_VMEM_LIMIT_BYTES),
    )(*operands)
    return out[0, 0]


# --------------------------------------------------------------------------
# Streamed path: one tiled reduce per large pair (native dtype in HBM).
# --------------------------------------------------------------------------
def _rowsum_groups(x, block_rows):
    """(block_rows, N) -> (8, N): sum 8-row groups with pure VALU vreg adds."""
    part = x[0:_SUBLANE]
    for g in range(1, block_rows // _SUBLANE):
        part = part + x[g * _SUBLANE:(g + 1) * _SUBLANE]
    return part


def _stream_pair_kernel(a_ref, b_ref, o_ref, acc_ref, *, kind, block_rows,
                        last_valid_rows):
    i = pl.program_id(0)
    nb = pl.num_programs(0)

    @pl.when(i == 0)
    def _init():
        acc_ref[...] = jnp.zeros_like(acc_ref)

    a = a_ref[...].astype(jnp.float32)
    b = b_ref[...].astype(jnp.float32)
    if kind == _KIND_MSE:
        d = a - b
        term = d * d
    else:
        term = a * b

    if last_valid_rows == block_rows:
        # Grid divides evenly: no masking anywhere.
        acc_ref[...] += _rowsum_groups(term, block_rows)
    else:
        @pl.when(i < nb - 1)
        def _full():
            acc_ref[...] += _rowsum_groups(term, block_rows)

        @pl.when(i == nb - 1)
        def _tail():
            rows = jax.lax.broadcasted_iota(jnp.int32, term.shape, 0)
            masked = jnp.where(rows < last_valid_rows, term, 0.0)
            acc_ref[...] += _rowsum_groups(masked, block_rows)

    @pl.when(i == nb - 1)
    def _fin():
        o_ref[0, 0] = jnp.sum(acc_ref[...])


def _stream_pair_sum(a2, b2, kind):
    M, N = a2.shape
    itemsize = max(a2.dtype.itemsize, b2.dtype.itemsize)
    rows_target = _STREAM_BLOCK_BYTES // max(1, N * itemsize)
    block_rows = max(_SUBLANE, (rows_target // _SUBLANE) * _SUBLANE)
    block_rows = min(block_rows, _MAX_BLOCK_ROWS, _round_up(M, _SUBLANE))
    nb = _cdiv(M, block_rows)
    last_valid = M - (nb - 1) * block_rows

    kernel = functools.partial(_stream_pair_kernel, kind=kind,
                               block_rows=block_rows, last_valid_rows=last_valid)
    out = pl.pallas_call(
        kernel,
        out_shape=jax.ShapeDtypeStruct((1, 1), jnp.float32),
        grid=(nb,),
        in_specs=[pl.BlockSpec((block_rows, N), lambda i: (i, 0)),
                  pl.BlockSpec((block_rows, N), lambda i: (i, 0))],
        out_specs=pl.BlockSpec(memory_space=pltpu.SMEM),
        scratch_shapes=[pltpu.VMEM((_SUBLANE, N), jnp.float32)],
        compiler_params=pltpu.CompilerParams(
            dimension_semantics=("arbitrary",),
            vmem_limit_bytes=_VMEM_LIMIT_BYTES),
    )(a2, b2)
    return out[0, 0]


# --------------------------------------------------------------------------
# Forward wrapper.
# --------------------------------------------------------------------------
@functools.lru_cache(maxsize=None)
def _get_forward_fn(kinds):
    kinds = tuple(kinds)

    @jax.jit
    def fwd(*arrays):
        # arrays = (a0, b0, a1, b1, ...); pair 0 is always the MSE pair.
        inv_n = 1.0 / float(arrays[0].size)
        resident, streamed = [], []
        resident_bytes = 0
        for p, kind in enumerate(kinds):
            a2 = _as_2d(arrays[2 * p])
            b2 = _as_2d(arrays[2 * p + 1])
            pair_bytes = (a2.size * a2.dtype.itemsize
                          + b2.size * b2.dtype.itemsize)
            if (pair_bytes > _STREAM_PAIR_BYTES
                    or resident_bytes + pair_bytes > _RESIDENT_BUDGET_BYTES):
                streamed.append((a2, b2, kind))
            else:
                resident.append((a2, b2, kind))
                resident_bytes += pair_bytes

        total = jnp.float32(0.0)
        if resident:
            total = total + _resident_sum(resident, inv_n)
        for a2, b2, kind in streamed:
            s = _stream_pair_sum(a2, b2, kind)
            total = total + (jnp.float32(inv_n) * s if kind == _KIND_MSE else -s)
        return total

    return fwd


def custom_mse_forward(output, target, x, wgrads, bgrads, level,
                       *, num_layers, vx_term):
    """Pallas implementation of CustomMSE.forward (no host-side repack)."""
    pairs = [(output, target)]
    kinds = [_KIND_MSE]
    if vx_term:
        lvl = 'level' + str(level + 1)
        for l in range(num_layers):
            fc = 'fc' + str(l)
            pairs.append((wgrads[lvl]['v_bar'][fc][-1], x.model[fc].weight))
            kinds.append(_KIND_DOT)
            pairs.append((bgrads[lvl]['v_bar'][fc][-1], x.model[fc].bias))
            kinds.append(_KIND_DOT)
    arrays = []
    for a, b in pairs:
        arrays += [jnp.asarray(a), jnp.asarray(b)]   # no dtype forcing
    return _get_forward_fn(tuple(kinds))(*arrays)


# ----- thin Python mirrors of the PyTorch objects the module indexes into -----
class LinearParams:
    def __init__(self, weight, bias):
        self.weight = weight  # (out, in)
        self.bias = bias      # (out,)


class ModelX:
    def __init__(self, model_dict):
        self.model = model_dict  # {'fc0': LinearParams, ...}


def _reference_forward(output, target, x, wgrads, bgrads, level,
                       *, num_layers, vx_term):
    """Pure-JAX reference for verification."""
    o = jnp.asarray(output, jnp.float32)
    t = jnp.asarray(target, jnp.float32)
    loss = jnp.mean((o - t) ** 2)
    if not vx_term:
        return loss
    v = jnp.float32(0.0)
    lvl = 'level' + str(level + 1)
    for l in range(num_layers):
        fc = 'fc' + str(l)
        vw = jnp.asarray(wgrads[lvl]['v_bar'][fc][-1], jnp.float32)
        vb = jnp.asarray(bgrads[lvl]['v_bar'][fc][-1], jnp.float32)
        w = jnp.asarray(x.model[fc].weight, jnp.float32)
        b = jnp.asarray(x.model[fc].bias, jnp.float32)
        v = v + jnp.sum(vw * w) + jnp.sum(vb * b)
    return loss - v


if __name__ == "__main__":
    level = 0
    key = jax.random.PRNGKey(0)
    keys = jax.random.split(key, 24)

    # ---- Case 1: small MLP, f32, vx_term=True (resident fused path) ----------
    num_layers = 2
    output = jax.random.normal(keys[0], (2, 8), dtype=jnp.float32)
    target = jax.random.normal(keys[1], (2, 8), dtype=jnp.float32)
    layer_shapes = [(32, 16), (8, 32)]  # fc0: 16->32, fc1: 32->8
    model, wg, bg = {}, {}, {}
    k = 2
    for l, (out_f, in_f) in enumerate(layer_shapes):
        w = jax.random.normal(keys[k], (out_f, in_f), dtype=jnp.float32) * 0.1
        b = jax.random.normal(keys[k + 1], (out_f,), dtype=jnp.float32) * 0.1
        vw = jax.random.normal(keys[k + 2], (out_f, in_f), dtype=jnp.float32) * 0.05
        vb = jax.random.normal(keys[k + 3], (out_f,), dtype=jnp.float32) * 0.05
        k += 4
        model['fc' + str(l)] = LinearParams(w, b)
        wg['fc' + str(l)] = [vw]
        bg['fc' + str(l)] = [vb]
    x = ModelX(model)
    wgrads = {'level1': {'v_bar': wg}}
    bgrads = {'level1': {'v_bar': bg}}

    loss = jax.block_until_ready(custom_mse_forward(
        output, target, x, wgrads, bgrads, level,
        num_layers=num_layers, vx_term=True))
    ref = jax.block_until_ready(_reference_forward(
        output, target, x, wgrads, bgrads, level,
        num_layers=num_layers, vx_term=True))
    assert jnp.allclose(loss, ref, atol=1e-5, rtol=1e-5), (loss, ref)

    # ---- Case 2: vx_term=False (plain MSE) ------------------------------------
    loss0 = jax.block_until_ready(custom_mse_forward(
        output, target, x, wgrads, bgrads, level,
        num_layers=num_layers, vx_term=False))
    ref0 = jnp.mean((output - target) ** 2)
    assert jnp.allclose(loss0, ref0, atol=1e-5, rtol=1e-5), (loss0, ref0)

    # ---- Case 3: bf16 params/grads (native-dtype streaming, in-kernel upcast) -
    w3 = (jax.random.normal(keys[10], (64, 48)) * 0.1).astype(jnp.bfloat16)
    b3 = (jax.random.normal(keys[11], (64,)) * 0.1).astype(jnp.bfloat16)
    vw3 = (jax.random.normal(keys[12], (64, 48)) * 0.05).astype(jnp.bfloat16)
    vb3 = (jax.random.normal(keys[13], (64,)) * 0.05).astype(jnp.bfloat16)
    out3 = jax.random.normal(keys[14], (4, 64), dtype=jnp.float32)
    tgt3 = jax.random.normal(keys[15], (4, 64), dtype=jnp.float32)
    x3 = ModelX({'fc0': LinearParams(w3, b3)})
    wgr3 = {'level1': {'v_bar': {'fc0': [vw3]}}}
    bgr3 = {'level1': {'v_bar': {'fc0': [vb3]}}}
    loss3 = jax.block_until_ready(custom_mse_forward(
        out3, tgt3, x3, wgr3, bgr3, 0, num_layers=1, vx_term=True))
    ref3 = jax.block_until_ready(_reference_forward(
        out3, tgt3, x3, wgr3, bgr3, 0, num_layers=1, vx_term=True))
    assert jnp.allclose(loss3, ref3, atol=1e-4, rtol=1e-4), (loss3, ref3)

    # ---- Case 4: larger layer -> streamed tiled path with masked tail block ---
    M4, N4 = 1029, 512  # 1029 % 1024 = 5 -> exercises the iota-masked last block
    w4 = jax.random.normal(keys[16], (M4, N4), dtype=jnp.float32) * 0.1
    b4 = jax.random.normal(keys[17], (M4,), dtype=jnp.float32) * 0.1
    vw4 = jax.random.normal(keys[18], (M4, N4), dtype=jnp.float32) * 0.05
    vb4 = jax.random.normal(keys[19], (M4,), dtype=jnp.float32) * 0.05
    out4 = jax.random.normal(keys[20], (32, 128), dtype=jnp.float32)
    tgt4 = jax.random.normal(keys[21], (32, 128), dtype=jnp.float32)
    x4 = ModelX({'fc0': LinearParams(w4, b4)})
    wgr4 = {'level1': {'v_bar': {'fc0': [vw4]}}}
    bgr4 = {'level1': {'v_bar': {'fc0': [vb4]}}}
    loss4 = jax.block_until_ready(custom_mse_forward(
        out4, tgt4, x4, wgr4, bgr4, 0, num_layers=1, vx_term=True))
    ref4 = jax.block_until_ready(_reference_forward(
        out4, tgt4, x4, wgr4, bgr4, 0, num_layers=1, vx_term=True))
    assert jnp.allclose(loss4, ref4, atol=1e-2, rtol=1e-3), (loss4, ref4)

    print("KERNEL_OK")
</pallas_src>

<mosaic_0001>
module attributes {stable_mosaic.version = 11 : i64} {
  func.func @kernel(%arg0: memref<2x8xf32, #tpu.memory_space<vmem>>, %arg1: memref<2x8xf32, #tpu.memory_space<vmem>>, %arg2: memref<32x16xf32, #tpu.memory_space<vmem>>, %arg3: memref<32x16xf32, #tpu.memory_space<vmem>>, %arg4: memref<1x32xf32, #tpu.memory_space<vmem>>, %arg5: memref<1x32xf32, #tpu.memory_space<vmem>>, %arg6: memref<8x32xf32, #tpu.memory_space<vmem>>, %arg7: memref<8x32xf32, #tpu.memory_space<vmem>>, %arg8: memref<1x8xf32, #tpu.memory_space<vmem>>, %arg9: memref<1x8xf32, #tpu.memory_space<vmem>>, %arg10: memref<1x1xf32, #tpu.memory_space<smem>>) attributes {dimension_semantics = [], scalar_prefetch = 0 : i64, scratch_operands = 0 : i64, tpu.core_type = #tpu.core_type<tc>} {
    %c0 = arith.constant 0 : index
    %c0_0 = arith.constant 0 : index
    %0 = vector.load %arg0[%c0, %c0_0] : memref<2x8xf32, #tpu.memory_space<vmem>>, vector<2x8xf32>
    %c0_1 = arith.constant 0 : index
    %c0_2 = arith.constant 0 : index
    %1 = vector.load %arg1[%c0_1, %c0_2] : memref<2x8xf32, #tpu.memory_space<vmem>>, vector<2x8xf32>
    %2 = arith.subf %0, %1 : vector<2x8xf32>
    %3 = arith.mulf %2, %2 : vector<2x8xf32>
    %4 = vector.shape_cast %3 : vector<2x8xf32> to vector<1x2x8xf32>
    %cst = arith.constant dense<0.000000e+00> : vector<1xf32>
    %5 = vector.multi_reduction <add>, %4, %cst [1, 2] : vector<1x2x8xf32> to vector<1xf32>
    %6 = vector.shape_cast %5 : vector<1xf32> to vector<1x1x1xf32>
    %7 = vector.extract %6[0, 0, 0] : f32 from vector<1x1x1xf32>
    %cst_3 = arith.constant 0.000000e+00 : f32
    %8 = arith.addf %cst_3, %7 : f32
    %c0_4 = arith.constant 0 : index
    %c0_5 = arith.constant 0 : index
    %9 = vector.load %arg2[%c0_4, %c0_5] : memref<32x16xf32, #tpu.memory_space<vmem>>, vector<32x16xf32>
    %c0_6 = arith.constant 0 : index
    %c0_7 = arith.constant 0 : index
    %10 = vector.load %arg3[%c0_6, %c0_7] : memref<32x16xf32, #tpu.memory_space<vmem>>, vector<32x16xf32>
    %11 = arith.mulf %9, %10 : vector<32x16xf32>
    %12 = vector.shape_cast %11 : vector<32x16xf32> to vector<1x32x16xf32>
    %cst_8 = arith.constant dense<0.000000e+00> : vector<1xf32>
    %13 = vector.multi_reduction <add>, %12, %cst_8 [1, 2] : vector<1x32x16xf32> to vector<1xf32>
    %14 = vector.shape_cast %13 : vector<1xf32> to vector<1x1x1xf32>
    %15 = vector.extract %14[0, 0, 0] : f32 from vector<1x1x1xf32>
    %cst_9 = arith.constant 0.000000e+00 : f32
    %16 = arith.addf %cst_9, %15 : f32
    %c0_10 = arith.constant 0 : index
    %c0_11 = arith.constant 0 : index
    %17 = vector.load %arg4[%c0_10, %c0_11] : memref<1x32xf32, #tpu.memory_space<vmem>>, vector<1x32xf32>
    %c0_12 = arith.constant 0 : index
    %c0_13 = arith.constant 0 : index
    %18 = vector.load %arg5[%c0_12, %c0_13] : memref<1x32xf32, #tpu.memory_space<vmem>>, vector<1x32xf32>
    %19 = arith.mulf %17, %18 : vector<1x32xf32>
    %20 = vector.shape_cast %19 : vector<1x32xf32> to vector<1x1x32xf32>
    %cst_14 = arith.constant dense<0.000000e+00> : vector<1xf32>
    %21 = vector.multi_reduction <add>, %20, %cst_14 [1, 2] : vector<1x1x32xf32> to vector<1xf32>
    %22 = vector.shape_cast %21 : vector<1xf32> to vector<1x1x1xf32>
    %23 = vector.extract %22[0, 0, 0] : f32 from vector<1x1x1xf32>
    %24 = arith.addf %16, %23 : f32
    %c0_15 = arith.constant 0 : index
    %c0_16 = arith.constant 0 : index
    %25 = vector.load %arg6[%c0_15, %c0_16] : memref<8x32xf32, #tpu.memory_space<vmem>>, vector<8x32xf32>
    %c0_17 = arith.constant 0 : index
    %c0_18 = arith.constant 0 : index
    %26 = vector.load %arg7[%c0_17, %c0_18] : memref<8x32xf32, #tpu.memory_space<vmem>>, vector<8x32xf32>
    %27 = arith.mulf %25, %26 : vector<8x32xf32>
    %28 = vector.shape_cast %27 : vector<8x32xf32> to vector<1x8x32xf32>
    %cst_19 = arith.constant dense<0.000000e+00> : vector<1xf32>
    %29 = vector.multi_reduction <add>, %28, %cst_19 [1, 2] : vector<1x8x32xf32> to vector<1xf32>
    %30 = vector.shape_cast %29 : vector<1xf32> to vector<1x1x1xf32>
    %31 = vector.extract %30[0, 0, 0] : f32 from vector<1x1x1xf32>
    %32 = arith.addf %24, %31 : f32
    %c0_20 = arith.constant 0 : index
    %c0_21 = arith.constant 0 : index
    %33 = vector.load %arg8[%c0_20, %c0_21] : memref<1x8xf32, #tpu.memory_space<vmem>>, vector<1x8xf32>
    %c0_22 = arith.constant 0 : index
    %c0_23 = arith.constant 0 : index
    %34 = vector.load %arg9[%c0_22, %c0_23] : memref<1x8xf32, #tpu.memory_space<vmem>>, vector<1x8xf32>
    %35 = arith.mulf %33, %34 : vector<1x8xf32>
    %36 = vector.shape_cast %35 : vector<1x8xf32> to vector<1x1x8xf32>
    %cst_24 = arith.constant dense<0.000000e+00> : vector<1xf32>
    %37 = vector.multi_reduction <add>, %36, %cst_24 [1, 2] : vector<1x1x8xf32> to vector<1xf32>
    %38 = vector.shape_cast %37 : vector<1xf32> to vector<1x1x1xf32>
    %39 = vector.extract %38[0, 0, 0] : f32 from vector<1x1x1xf32>
    %40 = arith.addf %32, %39 : f32
    %cst_25 = arith.constant 6.250000e-02 : f32
    %41 = arith.mulf %8, %cst_25 : f32
    %42 = arith.subf %41, %40 : f32
    %c0_26 = arith.constant 0 : index
    %c0_27 = arith.constant 0 : index
    %43 = memref.load %arg10[%c0_26, %c0_27] : memref<1x1xf32, #tpu.memory_space<smem>>
    memref.store %42, %arg10[%c0_26, %c0_27] : memref<1x1xf32, #tpu.memory_space<smem>>
    return
  }
}

</mosaic_0001>

<llo_original>
// kernel: fwd.1
$region0: #{fwd.1}
  #allocation0 [shape = 'u32[]', space=smem, size = 0x4, offset = 0x4, fixed_abs, tag = 'smem constant byte address 0x4 - core index']
  #allocation1 [shape = 'u32[144,128]{1,0:T(1,128)}', space=vmem, size = 0x12000, scoped, tag = 'internal scratch']
  %s0 = inlined_call_operand.vmem [shape: f32[2,8], index: 0, kind: input, shape index: {}]
  %s1 = inlined_call_operand.vmem [shape: f32[2,8], index: 1, kind: input, shape index: {}]
  %s2 = inlined_call_operand.vmem [shape: f32[32,16], index: 2, kind: input, shape index: {}]
  %s3 = inlined_call_operand.vmem [shape: f32[32,16], index: 3, kind: input, shape index: {}]
  %s4 = inlined_call_operand.vmem [shape: f32[1,32], index: 4, kind: input, shape index: {}]
  %s5 = inlined_call_operand.vmem [shape: f32[1,32], index: 5, kind: input, shape index: {}]
  %s6 = inlined_call_operand.vmem [shape: f32[8,32], index: 6, kind: input, shape index: {}]
  %s7 = inlined_call_operand.vmem [shape: f32[8,32], index: 7, kind: input, shape index: {}]
  %s8 = inlined_call_operand.vmem [shape: f32[1,8], index: 8, kind: input, shape index: {}]
  %s9 = inlined_call_operand.vmem [shape: f32[1,8], index: 9, kind: input, shape index: {}]
  %s10 = inlined_call_operand.hbm [shape: f32[1,1], index: 10, kind: output, shape index: {}]
  %s11 = sld [smem:[#allocation0]]
  $region50: #{fwd.1} parent=0
    _
  %s13 = ssub.s32 1, %s11
  %s14 = scalar_select 0, %s13, %s11
  $region1: #{fwd.1} parent=0
    #allocation2 [shape = 'u8[512]{0}', space=smem, size = 0x200, scoped, tag = 'output window, operand 0, single buffered']
    #allocation3 [shape = 's32[1]{0}', space=sflag, size = 0x4, scoped, tag = 'scoped memory for fwd.1']
    %15 = vsyncpa [#allocation3], 0
    // Predicated region
    $region2: #{fwd.1} parent=1 // pred_check
      _
    $region3: #{fwd.1} parent=1 // pred_check_branch
      %17 = sbr.rel (0) target = $region5
    $region4: #{fwd.1} parent=1 // pred_region
      _
    $region5: #{fwd.1} parent=1 // pred_fallthru
      _
    // Predicated region
    $region6: #{fwd.1} parent=1 // pred_check
      _
    $region7: #{fwd.1} parent=1 // pred_check_branch
      %19 = sbr.rel (0) target = $region9
    $region8: #{fwd.1} parent=1 // pred_region
      _
    $region9: #{fwd.1} parent=1 // pred_fallthru
      _
    // Predicated region
    $region10: #{fwd.1} parent=1 // pred_check
      _
    $region11: #{fwd.1} parent=1 // pred_check_branch
      %21 = sbr.rel (0) target = $region13
    $region12: #{fwd.1} parent=1 // pred_region
      _
    $region13: #{fwd.1} parent=1 // pred_fallthru
      _
    // Predicated region
    $region14: #{fwd.1} parent=1 // pred_check
      _
    $region15: #{fwd.1} parent=1 // pred_check_branch
      %23 = sbr.rel (0) target = $region17
    $region16: #{fwd.1} parent=1 // pred_region
      _
    $region17: #{fwd.1} parent=1 // pred_fallthru
      _
    // Predicated region
    $region18: #{fwd.1} parent=1 // pred_check
      _
    $region19: #{fwd.1} parent=1 // pred_check_branch
      %25 = sbr.rel (0) target = $region21
    $region20: #{fwd.1} parent=1 // pred_region
      _
    $region21: #{fwd.1} parent=1 // pred_fallthru
      _
    // Predicated region
    $region22: #{fwd.1} parent=1 // pred_check
      _
    $region23: #{fwd.1} parent=1 // pred_check_branch
      %27 = sbr.rel (0) target = $region25
    $region24: #{fwd.1} parent=1 // pred_region
      _
    $region25: #{fwd.1} parent=1 // pred_fallthru
      _
    // Predicated region
    $region26: #{fwd.1} parent=1 // pred_check
      _
    $region27: #{fwd.1} parent=1 // pred_check_branch
      %29 = sbr.rel (0) target = $region29
    $region28: #{fwd.1} parent=1 // pred_region
      _
    $region29: #{fwd.1} parent=1 // pred_fallthru
      _
    // Predicated region
    $region30: #{fwd.1} parent=1 // pred_check
      _
    $region31: #{fwd.1} parent=1 // pred_check_branch
      %31 = sbr.rel (0) target = $region33
    $region32: #{fwd.1} parent=1 // pred_region
      _
    $region33: #{fwd.1} parent=1 // pred_fallthru
      _
    // Predicated region
    $region34: #{fwd.1} parent=1 // pred_check
      _
    $region35: #{fwd.1} parent=1 // pred_check_branch
      %33 = sbr.rel (0) target = $region37
    $region36: #{fwd.1} parent=1 // pred_region
      _
    $region37: #{fwd.1} parent=1 // pred_fallthru
      _
    // Predicated region
    $region38: #{fwd.1} parent=1 // pred_check
      _
    $region39: #{fwd.1} parent=1 // pred_check_branch
      %35 = sbr.rel (0) target = $region41
    $region40: #{fwd.1} parent=1 // pred_region
      _
    $region41: #{fwd.1} parent=1 // pred_fallthru
      _
    %v36 = vld [vmem:[%s0] sm:$0x3]
    %v37 = vld [vmem:[%s1] sm:$0x3]
    %v38 = vsub.f32 %v36, %v37
    %v39 = vmul.f32 %v38, %v38
    %vm40 = vcmask 58368
    %v41 = vsel %vm40, %v39, 0.0
    %42 = vadd.xlane.f32.xlu0 %v41
    %v43 = vpop.xlane.xlu0 %42
    %v44 = vrot.slane %v43, 4
    %v45 = vadd.f32 %v43, %v44
    %v46 = vrot.slane %v45, 2
    %v47 = vadd.f32 %v45, %v46
    %v48 = vrot.slane %v47, 1
    %v49 = vadd.f32 %v47, %v48
    %s50 = vtos %v49
    %s51 = sadd.f32 %s50, 0.0
    %v52 = vld [vmem:[%s2] sm:$0xff]
    %v53 = vld [vmem:[%s2 + $0x8] sm:$0xff]
    %v54 = vld [vmem:[%s2 + $0x10] sm:$0xff]
    %v55 = vld [vmem:[%s2 + $0x18] sm:$0xff]
    %v56 = vld [vmem:[%s3] sm:$0xff]
    %v57 = vld [vmem:[%s3 + $0x8] sm:$0xff]
    %v58 = vld [vmem:[%s3 + $0x10] sm:$0xff]
    %v59 = vld [vmem:[%s3 + $0x18] sm:$0xff]
    %v60 = vmul.f32 %v52, %v56
    %v61 = vmul.f32 %v53, %v57
    %v62 = vmul.f32 %v54, %v58
    %v63 = vmul.f32 %v55, %v59
    %vm64 = vcmask 130048
    %v65 = vsel %vm64, %v60, 0.0
    %v66 = vsel %vm64, %v61, 0.0
    %v67 = vadd.f32 %v65, %v66
    %v68 = vsel %vm64, %v62, 0.0
    %v69 = vadd.f32 %v67, %v68
    %v70 = vsel %vm64, %v63, 0.0
    %v71 = vadd.f32 %v69, %v70
    %72 = vadd.xlane.f32.xlu0 %v71
    %v73 = vpop.xlane.xlu0 %72
    %v74 = vrot.slane %v73, 4
    %v75 = vadd.f32 %v73, %v74
    %v76 = vrot.slane %v75, 2
    %v77 = vadd.f32 %v75, %v76
    %v78 = vrot.slane %v77, 1
    %v79 = vadd.f32 %v77, %v78
    %s80 = vtos %v79
    %s81 = sadd.f32 %s80, 0.0
    %v82 = vld [vmem:[%s4] sm:$0x1]
    %v83 = vld [vmem:[%s5] sm:$0x1]
    %v84 = vmul.f32 %v82, %v83
    %vm85 = vcmask 253952
    %v86 = vsel %vm85, %v84, 0.0
    %87 = vadd.xlane.f32.xlu0 %v86
    %v88 = vpop.xlane.xlu0 %87
    %v89 = vrot.slane %v88, 4
    %v90 = vadd.f32 %v88, %v89
    %v91 = vrot.slane %v90, 2
    %v92 = vadd.f32 %v90, %v91
    %v93 = vrot.slane %v92, 1
    %v94 = vadd.f32 %v92, %v93
    %s95 = vtos %v94
    %s96 = sadd.f32 %s81, %s95
    %v97 = vld [vmem:[%s6] sm:$0xff]
    %v98 = vld [vmem:[%s7] sm:$0xff]
    %v99 = vmul.f32 %v97, %v98
    %vm100 = vcmask 261120
    %v101 = vsel %vm100, %v99, 0.0
    %102 = vadd.xlane.f32.xlu0 %v101
    %v103 = vpop.xlane.xlu0 %102
    %v104 = vrot.slane %v103, 4
    %v105 = vadd.f32 %v103, %v104
    %v106 = vrot.slane %v105, 2
    %v107 = vadd.f32 %v105, %v106
    %v108 = vrot.slane %v107, 1
    %v109 = vadd.f32 %v107, %v108
    %s110 = vtos %v109
    %s111 = sadd.f32 %s96, %s110
    %v112 = vld [vmem:[%s8] sm:$0x1]
    %v113 = vld [vmem:[%s9] sm:$0x1]
    %v114 = vmul.f32 %v112, %v113
    %vm115 = vcmask 57344
    %v116 = vsel %vm115, %v114, 0.0
    %117 = vadd.xlane.f32.xlu0 %v116
    %v118 = vpop.xlane.xlu0 %117
    %v119 = vrot.slane %v118, 4
    %v120 = vadd.f32 %v118, %v119
    %v121 = vrot.slane %v120, 2
    %v122 = vadd.f32 %v120, %v121
    %v123 = vrot.slane %v122, 1
    %v124 = vadd.f32 %v122, %v123
    %s125 = vtos %v124
    %s126 = sadd.f32 %s111, %s125
    %s127 = smul.f32 %s51, 0.0625
    %s128 = ssub.f32 %s127, %s126
    %s129 = scalar_lea.smem [#allocation2], 0
    %130 = sst [smem:[%s129]] %s128
    // Predicated region
    $region42: #{fwd.1} parent=1 // pred_check
      _
    $region43: #{fwd.1} parent=1 // pred_check_branch
      %132 = sbr.rel (0) target = $region45
    $region44: #{fwd.1} parent=1 // pred_region
      %s134 = ssub.s32 16, 16
      %135 = vsyncadd [#allocation3], %s134
      %138 = dma.smem_to_hbm [#allocation2], 16, %s10, [#allocation3]
    $region45: #{fwd.1} parent=1 // pred_fallthru
      _
    // Predicated region
    $region46: #{fwd.1} parent=1 // pred_check
      _
    $region47: #{fwd.1} parent=1 // pred_check_branch
      %140 = sbr.rel (0) target = $region49
    $region48: #{fwd.1} parent=1 // pred_region
      %141 = dma.done [#allocation3], 16
    $region49: #{fwd.1} parent=1 // pred_fallthru
      _
    %142 = sfence
    %143 = vsyncpa [#allocation3], 1

</llo_original>
